<compile_context>
chip_gen: v5e
topology: v5e:2x2
jax: 0.10.0
libtpu: 0.0.40
codegen_flags: <defaults>
</compile_context>

<pallas_src>
import jax
import jax.numpy as jnp
from jax.experimental import pallas as pl
from jax.experimental.pallas import tpu as pltpu


IN_DIM = 28 * 28          # 784
HID_DIM = 128
OUT_DIM = 64
OUT_PAD = 128             # lane-dense padded output width


def _round_up(n, m):
    return ((n + m - 1) // m) * m


# --------------------------------------------------------------------------
# Fused MLP kernel: Linear(784,128) + ReLU + Linear(128,128-padded) + ReLU
# --------------------------------------------------------------------------
def _mlp_kernel(x_ref, w1_ref, b1_ref, w2_ref, b2_ref, o_ref):
    # x_ref:  (TM, 784)  bf16
    # w1_ref: (784, 128) bf16, b1_ref: (1, 128) f32
    # w2_ref: (128, 128) bf16 (cols 64..127 are zero), b2_ref: (1, 128) f32
    # o_ref:  (TM, 128)  f32
    h = jnp.dot(x_ref[...], w1_ref[...], preferred_element_type=jnp.float32)
    h = jnp.maximum(h + b1_ref[...], 0.0)
    y = jnp.dot(h.astype(w2_ref.dtype), w2_ref[...],
                preferred_element_type=jnp.float32)
    o_ref[...] = jnp.maximum(y + b2_ref[...], 0.0)


# --------------------------------------------------------------------------
# Wrapper
# --------------------------------------------------------------------------
def mnist_encoder(x, p, *, block_rows=1024):
    """x: any shape whose trailing dims flatten to 784 -> (N, 64) float32."""
    x2 = x.reshape(-1, IN_DIM)
    n = x2.shape[0]

    # Tile size: at most block_rows, at least an 8-row (sublane) multiple.
    tm = min(block_rows, _round_up(n, 8))
    n_pad = _round_up(n, tm)
    if n_pad != n:
        x2 = jnp.pad(x2, ((0, n_pad - n), (0, 0)))
    x2 = x2.astype(jnp.bfloat16)

    grid = (n_pad // tm,)
    flops = 2 * n_pad * (IN_DIM * HID_DIM + HID_DIM * OUT_PAD)
    bytes_accessed = (
        n_pad * IN_DIM * 2              # x read (bf16)
        + n_pad * OUT_PAD * 4           # out write (f32)
        + IN_DIM * HID_DIM * 2          # w1 (bf16)
        + HID_DIM * OUT_PAD * 2         # w2 (bf16)
        + (HID_DIM + OUT_PAD) * 4       # biases (f32)
    )

    out = pl.pallas_call(
        _mlp_kernel,
        out_shape=jax.ShapeDtypeStruct((n_pad, OUT_PAD), jnp.float32),
        grid=grid,
        in_specs=[
            pl.BlockSpec((tm, IN_DIM), lambda i: (i, 0)),         # streamed x tile
            pl.BlockSpec((IN_DIM, HID_DIM), lambda i: (0, 0)),    # resident weights
            pl.BlockSpec((1, HID_DIM), lambda i: (0, 0)),
            pl.BlockSpec((HID_DIM, OUT_PAD), lambda i: (0, 0)),
            pl.BlockSpec((1, OUT_PAD), lambda i: (0, 0)),
        ],
        out_specs=pl.BlockSpec((tm, OUT_PAD), lambda i: (i, 0)),
        compiler_params=pltpu.CompilerParams(
            dimension_semantics=("parallel",)),                   # 2 TCs on v7x
        cost_estimate=pl.CostEstimate(
            flops=flops, transcendentals=0, bytes_accessed=bytes_accessed),
    )(x2, p["w1"], p["b1"], p["w2"], p["b2"])

    return out[:n, :OUT_DIM]


# --------------------------------------------------------------------------
# Parameter init (mimics PyTorch nn.Linear default: U(-1/sqrt(fan_in), +...))
# Canonical f32 params, weights stored (in, out) == transpose of PyTorch (out, in).
# --------------------------------------------------------------------------
def init_params(key):
    k1w, k1b, k2w, k2b = jax.random.split(key, 4)
    s1 = 1.0 / jnp.sqrt(float(IN_DIM))
    s2 = 1.0 / jnp.sqrt(float(HID_DIM))
    return {
        "w1": jax.random.uniform(k1w, (IN_DIM, HID_DIM), jnp.float32, -s1, s1),
        "b1": jax.random.uniform(k1b, (1, HID_DIM), jnp.float32, -s1, s1),
        "w2": jax.random.uniform(k2w, (HID_DIM, OUT_DIM), jnp.float32, -s2, s2),
        "b2": jax.random.uniform(k2b, (1, OUT_DIM), jnp.float32, -s2, s2),
    }


def prepare_params(p):
    """Cast weights to bf16 and zero-pad the last layer 64 -> 128 output lanes."""
    return {
        "w1": p["w1"].astype(jnp.bfloat16),
        "b1": p["b1"].astype(jnp.float32),
        "w2": jnp.pad(p["w2"], ((0, 0), (0, OUT_PAD - OUT_DIM))).astype(jnp.bfloat16),
        "b2": jnp.pad(p["b2"], ((0, 0), (0, OUT_PAD - OUT_DIM))).astype(jnp.float32),
    }


# --------------------------------------------------------------------------
# Pure-JAX reference (same cast discipline: bf16 operands, f32 accumulation)
# --------------------------------------------------------------------------
def reference_forward(x, p):
    x2 = x.reshape(-1, IN_DIM).astype(jnp.bfloat16)
    h = jnp.dot(x2, p["w1"].astype(jnp.bfloat16),
                preferred_element_type=jnp.float32) + p["b1"]
    h = jax.nn.relu(h)
    y = jnp.dot(h.astype(jnp.bfloat16), p["w2"].astype(jnp.bfloat16),
                preferred_element_type=jnp.float32) + p["b2"]
    return jax.nn.relu(y)


# --------------------------------------------------------------------------
if __name__ == "__main__":
    key = jax.random.PRNGKey(0)
    k_x, k_p = jax.random.split(key)

    # MNIST-shaped input implied by the module: view(-1, 784) -> (N, 1, 28, 28)
    x = jax.random.normal(k_x, (2, 1, 28, 28), dtype=jnp.float32)
    params = init_params(k_p)
    dev_params = prepare_params(params)

    out = jax.block_until_ready(jax.jit(mnist_encoder)(x, dev_params))
    ref = jax.block_until_ready(reference_forward(x, params))

    assert out.shape == (2, OUT_DIM), out.shape
    assert jnp.allclose(out, ref, atol=1e-2, rtol=1e-2), \
        float(jnp.max(jnp.abs(out - ref)))

    print("KERNEL_OK")
</pallas_src>

<mosaic_0001>
module attributes {stable_mosaic.version = 11 : i64} {
  func.func @_mlp_kernel(%arg0: i32, %arg1: memref<8x784xbf16, #tpu.memory_space<vmem>>, %arg2: memref<784x128xbf16, #tpu.memory_space<vmem>>, %arg3: memref<1x128xf32, #tpu.memory_space<vmem>>, %arg4: memref<128x128xbf16, #tpu.memory_space<vmem>>, %arg5: memref<1x128xf32, #tpu.memory_space<vmem>>, %arg6: memref<8x128xf32, #tpu.memory_space<vmem>>) attributes {dimension_semantics = [#tpu.dimension_semantics<parallel>], iteration_bounds = array<i64: 1>, scalar_prefetch = 0 : i64, scratch_operands = 0 : i64, tpu.core_type = #tpu.core_type<tc>, window_params = [{transform_indices = @transform_0, window_bounds = array<i64: 8, 784>}, {pipeline_mode = #tpu.pipeline_mode<synchronous>, transform_indices = @transform_1, window_bounds = array<i64: 784, 128>}, {pipeline_mode = #tpu.pipeline_mode<synchronous>, transform_indices = @transform_2, window_bounds = array<i64: 1, 128>}, {pipeline_mode = #tpu.pipeline_mode<synchronous>, transform_indices = @transform_3, window_bounds = array<i64: 128, 128>}, {pipeline_mode = #tpu.pipeline_mode<synchronous>, transform_indices = @transform_4, window_bounds = array<i64: 1, 128>}, {transform_indices = @transform_5, window_bounds = array<i64: 8, 128>}]} {
    %c0 = arith.constant 0 : index
    %c0_0 = arith.constant 0 : index
    %0 = vector.load %arg1[%c0, %c0_0] : memref<8x784xbf16, #tpu.memory_space<vmem>>, vector<8x784xbf16>
    %c0_1 = arith.constant 0 : index
    %c0_2 = arith.constant 0 : index
    %1 = vector.load %arg2[%c0_1, %c0_2] : memref<784x128xbf16, #tpu.memory_space<vmem>>, vector<784x128xbf16>
    %cst = arith.constant dense<0.000000e+00> : vector<8x128xf32>
    %2 = tpu.matmul %0, %1, %cst {dimension_numbers = #tpu.dot_dimension_numbers<[1], [0], [0], [1], [0, 0, 1, 1], [], []>} : vector<8x784xbf16>, vector<784x128xbf16>, vector<8x128xf32> -> vector<8x128xf32>
    %c0_3 = arith.constant 0 : index
    %c0_4 = arith.constant 0 : index
    %3 = vector.load %arg3[%c0_3, %c0_4] : memref<1x128xf32, #tpu.memory_space<vmem>>, vector<1x128xf32>
    %4 = vector.broadcast %3 : vector<1x128xf32> to vector<8x128xf32>
    %5 = arith.addf %2, %4 : vector<8x128xf32>
    %cst_5 = arith.constant 0.000000e+00 : f32
    %6 = vector.broadcast %cst_5 : f32 to vector<8x128xf32>
    %7 = arith.maximumf %5, %6 : vector<8x128xf32>
    %8 = arith.truncf %7 : vector<8x128xf32> to vector<8x128xbf16>
    %c0_6 = arith.constant 0 : index
    %c0_7 = arith.constant 0 : index
    %9 = vector.load %arg4[%c0_6, %c0_7] : memref<128x128xbf16, #tpu.memory_space<vmem>>, vector<128x128xbf16>
    %cst_8 = arith.constant dense<0.000000e+00> : vector<8x128xf32>
    %10 = tpu.matmul %8, %9, %cst_8 {dimension_numbers = #tpu.dot_dimension_numbers<[1], [0], [0], [1], [0, 0, 1, 1], [], []>} : vector<8x128xbf16>, vector<128x128xbf16>, vector<8x128xf32> -> vector<8x128xf32>
    %c0_9 = arith.constant 0 : index
    %c0_10 = arith.constant 0 : index
    %11 = vector.load %arg5[%c0_9, %c0_10] : memref<1x128xf32, #tpu.memory_space<vmem>>, vector<1x128xf32>
    %12 = vector.broadcast %11 : vector<1x128xf32> to vector<8x128xf32>
    %13 = arith.addf %10, %12 : vector<8x128xf32>
    %cst_11 = arith.constant 0.000000e+00 : f32
    %14 = vector.broadcast %cst_11 : f32 to vector<8x128xf32>
    %15 = arith.maximumf %13, %14 : vector<8x128xf32>
    %c0_12 = arith.constant 0 : index
    %c0_13 = arith.constant 0 : index
    %16 = vector.load %arg6[%c0_12, %c0_13] : memref<8x128xf32, #tpu.memory_space<vmem>>, vector<8x128xf32>
    tpu.vector_store %arg6[%c0_12, %c0_13], %15 {strides = array<i32>} : memref<8x128xf32, #tpu.memory_space<vmem>>, vector<8x128xf32>,
    return
  }
  func.func @transform_0(%arg0: i32) -> (i32, i32) {
    %c0_i32 = arith.constant 0 : i32
    %c0_i32_0 = arith.constant 0 : i32
    return %arg0, %c0_i32 : i32, i32
  }
  func.func @transform_1(%arg0: i32) -> (i32, i32) {
    %c0_i32 = arith.constant 0 : i32
    %c0_i32_0 = arith.constant 0 : i32
    %c0_i32_1 = arith.constant 0 : i32
    return %c0_i32, %c0_i32_0 : i32, i32
  }
  func.func @transform_2(%arg0: i32) -> (i32, i32) {
    %c0_i32 = arith.constant 0 : i32
    %c0_i32_0 = arith.constant 0 : i32
    %c0_i32_1 = arith.constant 0 : i32
    return %c0_i32, %c0_i32_0 : i32, i32
  }
  func.func @transform_3(%arg0: i32) -> (i32, i32) {
    %c0_i32 = arith.constant 0 : i32
    %c0_i32_0 = arith.constant 0 : i32
    %c0_i32_1 = arith.constant 0 : i32
    return %c0_i32, %c0_i32_0 : i32, i32
  }
  func.func @transform_4(%arg0: i32) -> (i32, i32) {
    %c0_i32 = arith.constant 0 : i32
    %c0_i32_0 = arith.constant 0 : i32
    %c0_i32_1 = arith.constant 0 : i32
    return %c0_i32, %c0_i32_0 : i32, i32
  }
  func.func @transform_5(%arg0: i32) -> (i32, i32) {
    %c0_i32 = arith.constant 0 : i32
    %c0_i32_0 = arith.constant 0 : i32
    return %arg0, %c0_i32 : i32, i32
  }
}

</mosaic_0001>

<llo_original>
// kernel: mnist_encoder.1
$region0: #{mnist_encoder.1}
  #allocation0 [shape = 'u32[]', space=smem, size = 0x4, offset = 0x4, fixed_abs, tag = 'smem constant byte address 0x4 - core index']
  #allocation1 [shape = 'u32[72,128]{1,0:T(1,128)}', space=vmem, size = 0x9000, scoped, tag = 'internal scratch']
  %s0 = inlined_call_operand.vmem [shape: bf16[8,784], index: 0, kind: input, shape index: {}]
  %s1 = inlined_call_operand.hbm [shape: bf16[784,128], index: 1, kind: input, shape index: {}]
  %s2 = inlined_call_operand.vmem [shape: f32[1,128], index: 2, kind: input, shape index: {}]
  %s3 = inlined_call_operand.vmem [shape: bf16[128,128], index: 3, kind: input, shape index: {}]
  %s4 = inlined_call_operand.vmem [shape: f32[1,128], index: 4, kind: input, shape index: {}]
  %s5 = inlined_call_operand.vmem [shape: f32[8,128], index: 5, kind: output, shape index: {}]
  %s6 = sld [smem:[#allocation0]]
  $region34: #{mnist_encoder.1} parent=0
    _
  %s8 = ssub.s32 1, %s6
  %s9 = scalar_select 0, %s8, %s6
  $region1: #{mnist_encoder.1} parent=0
    #allocation2 [shape = 'u8[200704]{0}', space=vmem, size = 0x31000, scoped, tag = 'input window, operand 1, single buffered']
    #allocation3 [shape = 's32[1]{0}', space=sflag, size = 0x4, scoped, tag = 'scoped memory for mnist_encoder.1']
    %10 = vsyncpa [#allocation3], 0
    // Predicated region
    $region2: #{mnist_encoder.1} parent=1 // pred_check
      _
    $region3: #{mnist_encoder.1} parent=1 // pred_check_branch
      %12 = sbr.rel (0) target = $region5
    $region4: #{mnist_encoder.1} parent=1 // pred_region
      _
    $region5: #{mnist_encoder.1} parent=1 // pred_fallthru
      _
    // Predicated region
    $region6: #{mnist_encoder.1} parent=1 // pred_check
      _
    $region7: #{mnist_encoder.1} parent=1 // pred_check_branch
      %14 = sbr.rel (0) target = $region9
    $region8: #{mnist_encoder.1} parent=1 // pred_region
      %16 = vsyncadd [#allocation3], 0
      %s17 = sshll.u32 %s1, 4
      %s18 = int_to_ptr.hbm [resolvable:$true] %s17
      %s19 = sshll.u32 [#allocation2], 4
      %s20 = int_to_ptr.vmem [resolvable:$true] %s19
      %25 = dma.hbm_to_vmem [thread:$0]  %s18, 6272, %s20, [#allocation3], 64, 64, 4
    $region9: #{mnist_encoder.1} parent=1 // pred_fallthru
      _
    // Predicated region
    $region10: #{mnist_encoder.1} parent=1 // pred_check
      _
    $region11: #{mnist_encoder.1} parent=1 // pred_check_branch
      %27 = sbr.rel (0) target = $region13
    $region12: #{mnist_encoder.1} parent=1 // pred_region
      _
    $region13: #{mnist_encoder.1} parent=1 // pred_fallthru
      _
    // Predicated region
    $region14: #{mnist_encoder.1} parent=1 // pred_check
      _
    $region15: #{mnist_encoder.1} parent=1 // pred_check_branch
      %29 = sbr.rel (0) target = $region17
    $region16: #{mnist_encoder.1} parent=1 // pred_region
      _
    $region17: #{mnist_encoder.1} parent=1 // pred_fallthru
      _
    // Predicated region
    $region18: #{mnist_encoder.1} parent=1 // pred_check
      _
    $region19: #{mnist_encoder.1} parent=1 // pred_check_branch
      %31 = sbr.rel (0) target = $region21
    $region20: #{mnist_encoder.1} parent=1 // pred_region
      _
    $region21: #{mnist_encoder.1} parent=1 // pred_fallthru
      _
    // Predicated region
    $region22: #{mnist_encoder.1} parent=1 // pred_check
      _
    $region23: #{mnist_encoder.1} parent=1 // pred_check_branch
      %33 = sbr.rel (0) target = $region25
    $region24: #{mnist_encoder.1} parent=1 // pred_region
      %35 = dma.done [#allocation3], 6272
    $region25: #{mnist_encoder.1} parent=1 // pred_fallthru
      _
    %v37 = vld [vmem:[%s0] sm:$0xff]
    %v38 = vld [vmem:[%s0 + $0x8] sm:$0xff]
    %v39 = vld [vmem:[%s0 + $0x10] sm:$0xff]
    %v40 = vld [vmem:[%s0 + $0x18] sm:$0xf]
    %v41 = vld [vmem:[#allocation2] sm:$0xf]
    %v42 = vld [vmem:[#allocation2 + $0x4] sm:$0xf]
    %v43 = vld [vmem:[#allocation2 + $0x8] sm:$0xf]
    %v44 = vld [vmem:[#allocation2 + $0xc] sm:$0xf]
    %v45 = vld [vmem:[#allocation2 + $0x10] sm:$0xf]
    %v46 = vld [vmem:[#allocation2 + $0x14] sm:$0xf]
    %v47 = vld [vmem:[#allocation2 + $0x18] sm:$0xf]
    %v48 = vld [vmem:[#allocation2 + $0x1c] sm:$0xf]
    %v49 = vld [vmem:[#allocation2 + $0x20] sm:$0xf]
    %v50 = vld [vmem:[#allocation2 + $0x24] sm:$0xf]
    %v51 = vld [vmem:[#allocation2 + $0x28] sm:$0xf]
    %v52 = vld [vmem:[#allocation2 + $0x2c] sm:$0xf]
    %v53 = vld [vmem:[#allocation2 + $0x30] sm:$0xf]
    %v54 = vld [vmem:[#allocation2 + $0x34] sm:$0xf]
    %v55 = vld [vmem:[#allocation2 + $0x38] sm:$0xf]
    %v56 = vld [vmem:[#allocation2 + $0x3c] sm:$0xf]
    %v57 = vld [vmem:[#allocation2 + $0x40] sm:$0xf]
    %v58 = vld [vmem:[#allocation2 + $0x44] sm:$0xf]
    %v59 = vld [vmem:[#allocation2 + $0x48] sm:$0xf]
    %v60 = vld [vmem:[#allocation2 + $0x4c] sm:$0xf]
    %v61 = vld [vmem:[#allocation2 + $0x50] sm:$0xf]
    %v62 = vld [vmem:[#allocation2 + $0x54] sm:$0xf]
    %v63 = vld [vmem:[#allocation2 + $0x58] sm:$0xf]
    %v64 = vld [vmem:[#allocation2 + $0x5c] sm:$0xf]
    %v65 = vld [vmem:[#allocation2 + $0x60] sm:$0xf]
    %v66 = vld [vmem:[#allocation2 + $0x64] sm:$0xf]
    %v67 = vld [vmem:[#allocation2 + $0x68] sm:$0xf]
    %v68 = vld [vmem:[#allocation2 + $0x6c] sm:$0xf]
    %v69 = vld [vmem:[#allocation2 + $0x70] sm:$0xf]
    %v70 = vld [vmem:[#allocation2 + $0x74] sm:$0xf]
    %v71 = vld [vmem:[#allocation2 + $0x78] sm:$0xf]
    %v72 = vld [vmem:[#allocation2 + $0x7c] sm:$0xf]
    %v73 = vld [vmem:[#allocation2 + $0x80] sm:$0xf]
    %v74 = vld [vmem:[#allocation2 + $0x84] sm:$0xf]
    %v75 = vld [vmem:[#allocation2 + $0x88] sm:$0xf]
    %v76 = vld [vmem:[#allocation2 + $0x8c] sm:$0xf]
    %v77 = vld [vmem:[#allocation2 + $0x90] sm:$0xf]
    %v78 = vld [vmem:[#allocation2 + $0x94] sm:$0xf]
    %v79 = vld [vmem:[#allocation2 + $0x98] sm:$0xf]
    %v80 = vld [vmem:[#allocation2 + $0x9c] sm:$0xf]
    %v81 = vld [vmem:[#allocation2 + $0xa0] sm:$0xf]
    %v82 = vld [vmem:[#allocation2 + $0xa4] sm:$0xf]
    %v83 = vld [vmem:[#allocation2 + $0xa8] sm:$0xf]
    %v84 = vld [vmem:[#allocation2 + $0xac] sm:$0xf]
    %v85 = vld [vmem:[#allocation2 + $0xb0] sm:$0xf]
    %v86 = vld [vmem:[#allocation2 + $0xb4] sm:$0xf]
    %v87 = vld [vmem:[#allocation2 + $0xb8] sm:$0xf]
    %v88 = vld [vmem:[#allocation2 + $0xbc] sm:$0xf]
    %v89 = vld [vmem:[#allocation2 + $0xc0] sm:$0xf]
    %v90 = vld [vmem:[#allocation2 + $0xc4] sm:$0xf]
    %v91 = vld [vmem:[#allocation2 + $0xc8] sm:$0xf]
    %v92 = vld [vmem:[#allocation2 + $0xcc] sm:$0xf]
    %v93 = vld [vmem:[#allocation2 + $0xd0] sm:$0xf]
    %v94 = vld [vmem:[#allocation2 + $0xd4] sm:$0xf]
    %v95 = vld [vmem:[#allocation2 + $0xd8] sm:$0xf]
    %v96 = vld [vmem:[#allocation2 + $0xdc] sm:$0xf]
    %v97 = vld [vmem:[#allocation2 + $0xe0] sm:$0xf]
    %v98 = vld [vmem:[#allocation2 + $0xe4] sm:$0xf]
    %v99 = vld [vmem:[#allocation2 + $0xe8] sm:$0xf]
    %v100 = vld [vmem:[#allocation2 + $0xec] sm:$0xf]
    %v101 = vld [vmem:[#allocation2 + $0xf0] sm:$0xf]
    %v102 = vld [vmem:[#allocation2 + $0xf4] sm:$0xf]
    %v103 = vld [vmem:[#allocation2 + $0xf8] sm:$0xf]
    %v104 = vld [vmem:[#allocation2 + $0xfc] sm:$0xf]
    %v105 = vld [vmem:[#allocation2 + $0x100] sm:$0xf]
    %v106 = vld [vmem:[#allocation2 + $0x104] sm:$0xf]
    %v107 = vld [vmem:[#allocation2 + $0x108] sm:$0xf]
    %v108 = vld [vmem:[#allocation2 + $0x10c] sm:$0xf]
    %v109 = vld [vmem:[#allocation2 + $0x110] sm:$0xf]
    %v110 = vld [vmem:[#allocation2 + $0x114] sm:$0xf]
    %v111 = vld [vmem:[#allocation2 + $0x118] sm:$0xf]
    %v112 = vld [vmem:[#allocation2 + $0x11c] sm:$0xf]
    %v113 = vld [vmem:[#allocation2 + $0x120] sm:$0xf]
    %v114 = vld [vmem:[#allocation2 + $0x124] sm:$0xf]
    %v115 = vld [vmem:[#allocation2 + $0x128] sm:$0xf]
    %v116 = vld [vmem:[#allocation2 + $0x12c] sm:$0xf]
    %v117 = vld [vmem:[#allocation2 + $0x130] sm:$0xf]
    %v118 = vld [vmem:[#allocation2 + $0x134] sm:$0xf]
    %v119 = vld [vmem:[#allocation2 + $0x138] sm:$0xf]
    %v120 = vld [vmem:[#allocation2 + $0x13c] sm:$0xf]
    %v121 = vld [vmem:[#allocation2 + $0x140] sm:$0xf]
    %v122 = vld [vmem:[#allocation2 + $0x144] sm:$0xf]
    %v123 = vld [vmem:[#allocation2 + $0x148] sm:$0xf]
    %v124 = vld [vmem:[#allocation2 + $0x14c] sm:$0xf]
    %v125 = vld [vmem:[#allocation2 + $0x150] sm:$0xf]
    %v126 = vld [vmem:[#allocation2 + $0x154] sm:$0xf]
    %v127 = vld [vmem:[#allocation2 + $0x158] sm:$0xf]
    %v128 = vld [vmem:[#allocation2 + $0x15c] sm:$0xf]
    %v129 = vld [vmem:[#allocation2 + $0x160] sm:$0xf]
    %v130 = vld [vmem:[#allocation2 + $0x164] sm:$0xf]
    %v131 = vld [vmem:[#allocation2 + $0x168] sm:$0xf]
    %v132 = vld [vmem:[#allocation2 + $0x16c] sm:$0xf]
    %v133 = vld [vmem:[#allocation2 + $0x170] sm:$0xf]
    %v134 = vld [vmem:[#allocation2 + $0x174] sm:$0xf]
    %v135 = vld [vmem:[#allocation2 + $0x178] sm:$0xf]
    %v136 = vld [vmem:[#allocation2 + $0x17c] sm:$0xf]
    %v137 = vld [vmem:[#allocation2 + $0x180] sm:$0xf]
    %v138 = vld [vmem:[#allocation2 + $0x184] sm:$0xf]
    %v139 = vld [vmem:[%s2] sm:$0x1]
    %v141 = vperm.slane %v139, 0
    %v147 = vunpack.c.l.b16 %v37
    %v148 = vunpack.c.h.b16 %v37
    %v149 = vunpack.c.l.b16 %v38
    %v150 = vunpack.c.h.b16 %v38
    %v151 = vunpack.c.l.b16 %v39
    %v152 = vunpack.c.h.b16 %v39
    %v153 = vunpack.c.l.b16 %v40
    %v154 = vpack.c.b16 %v147, %v147
    %v155 = vpack.c.b16 %v148, %v148
    %v156 = vpack.c.b16 %v149, %v149
    %v157 = vpack.c.b16 %v150, %v150
    %v158 = vpack.c.b16 %v151, %v151
    %v159 = vpack.c.b16 %v152, %v152
    %v160 = vpack.c.b16 %v153, %v153
    %v265 = vunpack.c.l.b16 %v41
    %v266 = vunpack.c.l.b16 %v42
    %v267 = vunpack.c.l.b16 %v43
    %v268 = vunpack.c.l.b16 %v44
    %v269 = vunpack.c.l.b16 %v45
    %v270 = vunpack.c.l.b16 %v46
    %v271 = vunpack.c.l.b16 %v47
    %v272 = vunpack.c.l.b16 %v48
    %v273 = vunpack.c.l.b16 %v49
    %v274 = vunpack.c.l.b16 %v50
    %v275 = vunpack.c.l.b16 %v51
    %v276 = vunpack.c.l.b16 %v52
    %v277 = vunpack.c.l.b16 %v53
    %v278 = vunpack.c.l.b16 %v54
    %v279 = vunpack.c.l.b16 %v55
    %v280 = vunpack.c.l.b16 %v56
    %v281 = vunpack.c.l.b16 %v57
    %v282 = vunpack.c.l.b16 %v58
    %v283 = vunpack.c.l.b16 %v59
    %v284 = vunpack.c.l.b16 %v60
    %v285 = vunpack.c.l.b16 %v61
    %v286 = vunpack.c.l.b16 %v62
    %v287 = vunpack.c.l.b16 %v63
    %v288 = vunpack.c.l.b16 %v64
    %v289 = vunpack.c.l.b16 %v65
    %v290 = vunpack.c.l.b16 %v66
    %v291 = vunpack.c.l.b16 %v67
    %v292 = vunpack.c.l.b16 %v68
    %v293 = vunpack.c.l.b16 %v69
    %v294 = vunpack.c.l.b16 %v70
    %v295 = vunpack.c.l.b16 %v71
    %v296 = vunpack.c.l.b16 %v72
    %v297 = vunpack.c.l.b16 %v73
    %v298 = vunpack.c.l.b16 %v74
    %v299 = vunpack.c.l.b16 %v75
    %v300 = vunpack.c.l.b16 %v76
    %v301 = vunpack.c.l.b16 %v77
    %v302 = vunpack.c.l.b16 %v78
    %v303 = vunpack.c.l.b16 %v79
    %v304 = vunpack.c.l.b16 %v80
    %v305 = vunpack.c.l.b16 %v81
    %v306 = vunpack.c.l.b16 %v82
    %v307 = vunpack.c.l.b16 %v83
    %v308 = vunpack.c.l.b16 %v84
    %v309 = vunpack.c.l.b16 %v85
    %v310 = vunpack.c.l.b16 %v86
    %v311 = vunpack.c.l.b16 %v87
    %v312 = vunpack.c.l.b16 %v88
    %v313 = vunpack.c.l.b16 %v89
    %v314 = vunpack.c.l.b16 %v90
    %v315 = vunpack.c.l.b16 %v91
    %v316 = vunpack.c.l.b16 %v92
    %v317 = vunpack.c.l.b16 %v93
    %v318 = vunpack.c.l.b16 %v94
    %v319 = vunpack.c.l.b16 %v95
    %v320 = vunpack.c.l.b16 %v96
    %v321 = vunpack.c.l.b16 %v97
    %v322 = vunpack.c.l.b16 %v98
    %v323 = vunpack.c.l.b16 %v99
    %v324 = vunpack.c.l.b16 %v100
    %v325 = vunpack.c.l.b16 %v101
    %v326 = vunpack.c.l.b16 %v102
    %v327 = vunpack.c.l.b16 %v103
    %v328 = vunpack.c.l.b16 %v104
    %v329 = vunpack.c.l.b16 %v105
    %v330 = vunpack.c.l.b16 %v106
    %v331 = vunpack.c.l.b16 %v107
    %v332 = vunpack.c.l.b16 %v108
    %v333 = vunpack.c.l.b16 %v109
    %v334 = vunpack.c.l.b16 %v110
    %v335 = vunpack.c.l.b16 %v111
    %v336 = vunpack.c.l.b16 %v112
    %v337 = vunpack.c.l.b16 %v113
    %v338 = vunpack.c.l.b16 %v114
    %v339 = vunpack.c.l.b16 %v115
    %v340 = vunpack.c.l.b16 %v116
    %v341 = vunpack.c.l.b16 %v117
    %v342 = vunpack.c.l.b16 %v118
    %v343 = vunpack.c.l.b16 %v119
    %v344 = vunpack.c.l.b16 %v120
    %v345 = vunpack.c.l.b16 %v121
    %v346 = vunpack.c.l.b16 %v122
    %v347 = vunpack.c.l.b16 %v123
    %v348 = vunpack.c.l.b16 %v124
    %v349 = vunpack.c.l.b16 %v125
    %v350 = vunpack.c.l.b16 %v126
    %v351 = vunpack.c.l.b16 %v127
    %v352 = vunpack.c.l.b16 %v128
    %v353 = vunpack.c.l.b16 %v129
    %v354 = vunpack.c.l.b16 %v130
    %v355 = vunpack.c.l.b16 %v131
    %v356 = vunpack.c.l.b16 %v132
    %v357 = vunpack.c.l.b16 %v133
    %v358 = vunpack.c.l.b16 %v134
    %v359 = vunpack.c.l.b16 %v135
    %v360 = vunpack.c.l.b16 %v136
    %v361 = vunpack.c.l.b16 %v137
    %v362 = vunpack.c.l.b16 %v138
    %v363 = vpack.c.b16 %v266, %v265
    %v364 = vpack.c.b16 %v268, %v267
    %v365 = vpack.c.b16 %v270, %v269
    %v366 = vpack.c.b16 %v272, %v271
    %v367 = vpack.c.b16 %v274, %v273
    %v368 = vpack.c.b16 %v276, %v275
    %v369 = vpack.c.b16 %v278, %v277
    %v370 = vpack.c.b16 %v280, %v279
    %v371 = vpack.c.b16 %v282, %v281
    %v372 = vpack.c.b16 %v284, %v283
    %v373 = vpack.c.b16 %v286, %v285
    %v374 = vpack.c.b16 %v288, %v287
    %v375 = vpack.c.b16 %v290, %v289
    %v376 = vpack.c.b16 %v292, %v291
    %v377 = vpack.c.b16 %v294, %v293
    %v378 = vpack.c.b16 %v296, %v295
    %v379 = vpack.c.b16 %v298, %v297
    %v380 = vpack.c.b16 %v300, %v299
    %v381 = vpack.c.b16 %v302, %v301
    %v382 = vpack.c.b16 %v304, %v303
    %v383 = vpack.c.b16 %v306, %v305
    %v384 = vpack.c.b16 %v308, %v307
    %v385 = vpack.c.b16 %v310, %v309
    %v386 = vpack.c.b16 %v312, %v311
    %v387 = vpack.c.b16 %v314, %v313
    %v388 = vpack.c.b16 %v316, %v315
    %v389 = vpack.c.b16 %v318, %v317
    %v390 = vpack.c.b16 %v320, %v319
    %v391 = vpack.c.b16 %v322, %v321
    %v392 = vpack.c.b16 %v324, %v323
    %v393 = vpack.c.b16 %v326, %v325
    %v394 = vpack.c.b16 %v328, %v327
    %v395 = vpack.c.b16 %v330, %v329
    %v396 = vpack.c.b16 %v332, %v331
    %v397 = vpack.c.b16 %v334, %v333
    %v398 = vpack.c.b16 %v336, %v335
    %v399 = vpack.c.b16 %v338, %v337
    %v400 = vpack.c.b16 %v340, %v339
    %v401 = vpack.c.b16 %v342, %v341
    %v402 = vpack.c.b16 %v344, %v343
    %v403 = vpack.c.b16 %v346, %v345
    %v404 = vpack.c.b16 %v348, %v347
    %v405 = vpack.c.b16 %v350, %v349
    %v406 = vpack.c.b16 %v352, %v351
    %v407 = vpack.c.b16 %v354, %v353
    %v408 = vpack.c.b16 %v356, %v355
    %v409 = vpack.c.b16 %v358, %v357
    %v410 = vpack.c.b16 %v360, %v359
    %v411 = vpack.c.b16 %v362, %v361
    %vm461 = vcmask 130048
    %v463 = vsel %vm461, %v160, 0
    %465 = vmatpush.bf16.msra.mxu0 %v370
    %466 = vmatpush.bf16.msra.mxu0 %v369
    %467 = vmatpush.bf16.msra.mxu0 %v368
    %468 = vmatpush.bf16.msra.mxu0 %v367
    %469 = vmatpush.bf16.msra.mxu0 %v366
    %470 = vmatpush.bf16.msra.mxu0 %v365
    %471 = vmatpush.bf16.msra.mxu0 %v364
    %472 = vmatpush.bf16.msra.mxu0 %v363
    %473 = vmatmul.bf16.gmra.mxu0 %v154
    %v474 = vpop.f32.mrf.mxu0
    %v475 = vadd.f32 %v141, %v474
    %v476 = vpop.f32.mrf.mxu0
    %477 = vdwg.mxu0
    %478 = vmatpush.bf16.msra.mxu0 %v378
    %479 = vmatpush.bf16.msra.mxu0 %v377
    %480 = vmatpush.bf16.msra.mxu0 %v376
    %481 = vmatpush.bf16.msra.mxu0 %v375
    %482 = vmatpush.bf16.msra.mxu0 %v374
    %483 = vmatpush.bf16.msra.mxu0 %v373
    %484 = vmatpush.bf16.msra.mxu0 %v372
    %485 = vmatpush.bf16.msra.mxu0 %v371
    %486 = vmatmul.bf16.gmra.mxu0 %v155
    %v487 = vpop.f32.mrf.mxu0
    %v488 = vadd.f32 %v475, %v487
    %v489 = vpop.f32.mrf.mxu0
    %490 = vdwg.mxu0
    %491 = vmatpush.bf16.msra.mxu0 %v386
    %492 = vmatpush.bf16.msra.mxu0 %v385
    %493 = vmatpush.bf16.msra.mxu0 %v384
    %494 = vmatpush.bf16.msra.mxu0 %v383
    %495 = vmatpush.bf16.msra.mxu0 %v382
    %496 = vmatpush.bf16.msra.mxu0 %v381
    %497 = vmatpush.bf16.msra.mxu0 %v380
    %498 = vmatpush.bf16.msra.mxu0 %v379
    %499 = vmatmul.bf16.gmra.mxu0 %v156
    %v500 = vpop.f32.mrf.mxu0
    %v501 = vadd.f32 %v488, %v500
    %v502 = vpop.f32.mrf.mxu0
    %503 = vdwg.mxu0
    %504 = vmatpush.bf16.msra.mxu0 %v394
    %505 = vmatpush.bf16.msra.mxu0 %v393
    %506 = vmatpush.bf16.msra.mxu0 %v392
    %507 = vmatpush.bf16.msra.mxu0 %v391
    %508 = vmatpush.bf16.msra.mxu0 %v390
    %509 = vmatpush.bf16.msra.mxu0 %v389
    %510 = vmatpush.bf16.msra.mxu0 %v388
    %511 = vmatpush.bf16.msra.mxu0 %v387
    %512 = vmatmul.bf16.gmra.mxu0 %v157
    %v513 = vpop.f32.mrf.mxu0
    %v514 = vadd.f32 %v501, %v513
    %v515 = vpop.f32.mrf.mxu0
    %516 = vdwg.mxu0
    %517 = vmatpush.bf16.msra.mxu0 %v402
    %518 = vmatpush.bf16.msra.mxu0 %v401
    %519 = vmatpush.bf16.msra.mxu0 %v400
    %520 = vmatpush.bf16.msra.mxu0 %v399
    %521 = vmatpush.bf16.msra.mxu0 %v398
    %522 = vmatpush.bf16.msra.mxu0 %v397
    %523 = vmatpush.bf16.msra.mxu0 %v396
    %524 = vmatpush.bf16.msra.mxu0 %v395
    %525 = vmatmul.bf16.gmra.mxu0 %v158
    %v526 = vpop.f32.mrf.mxu0
    %v527 = vadd.f32 %v514, %v526
    %v528 = vpop.f32.mrf.mxu0
    %529 = vdwg.mxu0
    %530 = vmatpush.bf16.msra.mxu0 %v410
    %531 = vmatpush.bf16.msra.mxu0 %v409
    %532 = vmatpush.bf16.msra.mxu0 %v408
    %533 = vmatpush.bf16.msra.mxu0 %v407
    %534 = vmatpush.bf16.msra.mxu0 %v406
    %535 = vmatpush.bf16.msra.mxu0 %v405
    %536 = vmatpush.bf16.msra.mxu0 %v404
    %537 = vmatpush.bf16.msra.mxu0 %v403
    %538 = vmatmul.bf16.gmra.mxu0 %v159
    %v539 = vpop.f32.mrf.mxu0
    %v540 = vadd.f32 %v527, %v539
    %v541 = vpop.f32.mrf.mxu0
    %542 = vdwg.mxu0
    %543 = vmatpush.bf16.msra.mxu0 0
    %544 = vmatpush.bf16.msra.mxu0 0
    %545 = vmatpush.bf16.msra.mxu0 0
    %546 = vmatpush.bf16.msra.mxu0 0
    %547 = vmatpush.bf16.msra.mxu0 0
    %548 = vmatpush.bf16.msra.mxu0 0
    %549 = vmatpush.bf16.msra.mxu0 0
    %550 = vmatpush.bf16.msra.mxu0 %v411
    %551 = vmatmul.bf16.gmra.mxu0 %v463
    %v552 = vpop.f32.mrf.mxu0
    %v553 = vadd.f32 %v540, %v552
    %v554 = vpop.f32.mrf.mxu0
    %555 = vdwg.mxu0
    %v556 = vmax.f32 %v553, 0.0
    %v557 = vpack.c.bf16 %v556, %v556
    %v558 = vld [vmem:[%s3] sm:$0xf]
    %v559 = vld [vmem:[%s3 + $0x4] sm:$0xf]
    %v560 = vld [vmem:[%s3 + $0x8] sm:$0xf]
    %v561 = vld [vmem:[%s3 + $0xc] sm:$0xf]
    %v562 = vld [vmem:[%s3 + $0x10] sm:$0xf]
    %v563 = vld [vmem:[%s3 + $0x14] sm:$0xf]
    %v564 = vld [vmem:[%s3 + $0x18] sm:$0xf]
    %v565 = vld [vmem:[%s3 + $0x1c] sm:$0xf]
    %v566 = vld [vmem:[%s3 + $0x20] sm:$0xf]
    %v567 = vld [vmem:[%s3 + $0x24] sm:$0xf]
    %v568 = vld [vmem:[%s3 + $0x28] sm:$0xf]
    %v569 = vld [vmem:[%s3 + $0x2c] sm:$0xf]
    %v570 = vld [vmem:[%s3 + $0x30] sm:$0xf]
    %v571 = vld [vmem:[%s3 + $0x34] sm:$0xf]
    %v572 = vld [vmem:[%s3 + $0x38] sm:$0xf]
    %v573 = vld [vmem:[%s3 + $0x3c] sm:$0xf]
    %v574 = vld [vmem:[%s4] sm:$0x1]
    %v576 = vperm.slane %v574, 0
    %v594 = vunpack.c.l.b16 %v558
    %v595 = vunpack.c.l.b16 %v559
    %v596 = vunpack.c.l.b16 %v560
    %v597 = vunpack.c.l.b16 %v561
    %v598 = vunpack.c.l.b16 %v562
    %v599 = vunpack.c.l.b16 %v563
    %v600 = vunpack.c.l.b16 %v564
    %v601 = vunpack.c.l.b16 %v565
    %v602 = vunpack.c.l.b16 %v566
    %v603 = vunpack.c.l.b16 %v567
    %v604 = vunpack.c.l.b16 %v568
    %v605 = vunpack.c.l.b16 %v569
    %v606 = vunpack.c.l.b16 %v570
    %v607 = vunpack.c.l.b16 %v571
    %v608 = vunpack.c.l.b16 %v572
    %v609 = vunpack.c.l.b16 %v573
    %v610 = vpack.c.b16 %v595, %v594
    %v611 = vpack.c.b16 %v597, %v596
    %v612 = vpack.c.b16 %v599, %v598
    %v613 = vpack.c.b16 %v601, %v600
    %v614 = vpack.c.b16 %v603, %v602
    %v615 = vpack.c.b16 %v605, %v604
    %v616 = vpack.c.b16 %v607, %v606
    %v617 = vpack.c.b16 %v609, %v608
    %626 = vmatpush.bf16.msra.mxu0 %v617
    %627 = vmatpush.bf16.msra.mxu0 %v616
    %628 = vmatpush.bf16.msra.mxu0 %v615
    %629 = vmatpush.bf16.msra.mxu0 %v614
    %630 = vmatpush.bf16.msra.mxu0 %v613
    %631 = vmatpush.bf16.msra.mxu0 %v612
    %632 = vmatpush.bf16.msra.mxu0 %v611
    %633 = vmatpush.bf16.msra.mxu0 %v610
    %634 = vmatmul.bf16.gmra.mxu0 %v557
    %v635 = vpop.f32.mrf.mxu0
    %v636 = vadd.f32 %v576, %v635
    %v637 = vpop.f32.mrf.mxu0
    %638 = vdwg.mxu0
    %v639 = vmax.f32 %v636, 0.0
    %640 = vst [vmem:[%s5] sm:$0xff] %v639
    // Predicated region
    $region26: #{mnist_encoder.1} parent=1 // pred_check
      _
    $region27: #{mnist_encoder.1} parent=1 // pred_check_branch
      %642 = sbr.rel (0) target = $region29
    $region28: #{mnist_encoder.1} parent=1 // pred_region
      _
    $region29: #{mnist_encoder.1} parent=1 // pred_fallthru
      _
    // Predicated region
    $region30: #{mnist_encoder.1} parent=1 // pred_check
      _
    $region31: #{mnist_encoder.1} parent=1 // pred_check_branch
      %644 = sbr.rel (0) target = $region33
    $region32: #{mnist_encoder.1} parent=1 // pred_region
      _
    $region33: #{mnist_encoder.1} parent=1 // pred_fallthru
      _
    %645 = vsyncpa [#allocation3], 1

</llo_original>
